<compile_context>
chip_gen: v5e
topology: v5e:2x2
jax: 0.10.0
libtpu: 0.0.40
codegen_flags: <defaults>
</compile_context>

<pallas_src>
import functools
import math

import jax
import jax.numpy as jnp
from jax import lax
from jax.experimental import pallas as pl
from jax.experimental.pallas import tpu as pltpu


def _mha_kernel(n_heads, d_k, compute_dtype,
                q_ref, k_ref, v_ref,
                wq_ref, bq_ref, wk_ref, bk_ref,
                wv_ref, bv_ref, wo_ref, bo_ref,
                out_ref,
                kp_ref, vp_ref, ctx_ref):
    """One (batch element, query tile) per grid step.

    q_ref         : (tq, D)   (batch dim squeezed away by pl.Squeezed())
    k_ref / v_ref : (S,  D)   resident across q tiles (index_map depends on b only)
    w*_ref        : (D,  D)   (already transposed: x @ W + b), single-buffered
    b*_ref        : (1,  D)
    out_ref       : (tq, D)
    kp_ref/vp_ref : (S,  D)   VMEM scratch: cached K/V projections (compute dtype)
    ctx_ref       : (tq, D)   VMEM scratch: concatenated per-head contexts
    """
    inv_sqrt_dk = jnp.float32(1.0 / math.sqrt(d_k))

    # --- K/V projections: once per batch element, reused by every q tile. ---
    @pl.when(pl.program_id(1) == 0)
    def _():
        kp = jnp.dot(k_ref[...], wk_ref[...],
                     preferred_element_type=jnp.float32) + bk_ref[...]
        vp = jnp.dot(v_ref[...], wv_ref[...],
                     preferred_element_type=jnp.float32) + bv_ref[...]
        kp_ref[...] = kp.astype(compute_dtype)
        vp_ref[...] = vp.astype(compute_dtype)

    # --- Q projection for this tile (f32 accumulate, then compute dtype). ---
    qp = jnp.dot(q_ref[...], wq_ref[...],
                 preferred_element_type=jnp.float32) + bq_ref[...]
    qp = (qp * inv_sqrt_dk).astype(compute_dtype)        # scale once, not per head

    kp = kp_ref[...]                                      # (S, D) compute dtype
    vp = vp_ref[...]                                      # (S, D) compute dtype

    # --- Per-head attention; contexts written into the (tq, D) slab. ---
    for h in range(n_heads):                              # static, small
        lo = h * d_k
        qh = qp[:, lo:lo + d_k]                           # (tq, d_k)
        kh = kp[:, lo:lo + d_k]                           # (S,  d_k)
        vh = vp[:, lo:lo + d_k]                           # (S,  d_k)

        # scores = qh @ kh^T without materializing a transpose.
        scores = lax.dot_general(
            qh, kh, (((1,), (1,)), ((), ())),
            preferred_element_type=jnp.float32)           # (tq, S) f32

        m = jnp.max(scores, axis=-1, keepdims=True)
        e = jnp.exp(scores - m)
        p = e * pl.reciprocal(jnp.sum(e, axis=-1, keepdims=True), approx=True)

        ctx = jnp.dot(p.astype(compute_dtype), vh,
                      preferred_element_type=jnp.float32)  # (tq, d_k)
        ctx_ref[:, lo:lo + d_k] = ctx.astype(compute_dtype)

    # --- Single full-depth (K = D) output projection. ---
    out = jnp.dot(ctx_ref[...], wo_ref[...],
                  preferred_element_type=jnp.float32) + bo_ref[...]
    out_ref[...] = out.astype(out_ref.dtype)


def _choose_query_tile(S):
    """Largest 'nice' tile (<=512, multiple of 8) that divides S, else S."""
    for t in (512, 256, 128, 64, 32, 16, 8):
        if S % t == 0:
            return t
    return S


def _vmem_limit_bytes():
    """~75% of physical VMEM, capped at 100 MiB (≈96 MiB v5e/v6e, ≈48 MiB v7x)."""
    cap = 64 * 1024 * 1024
    try:
        cap = int(pltpu.get_tpu_info().vmem_capacity_bytes)
    except Exception:
        pass
    return min(100 * 1024 * 1024, (cap * 3) // 4)


def multi_head_attention(Q, K, V, params, *, n_heads):
    """Q, K, V: (B, S, D).  params: dict of weights (D, D) and biases (1, D)."""
    B, S, D = Q.shape
    d_k = D // n_heads
    tq = _choose_query_tile(S)
    num_q_tiles = S // tq

    # Activations / MXU operand dtype: bf16 inputs stay bf16 (full-rate MXU,
    # half the intermediate footprint); f32 inputs stay f32.
    compute_dtype = Q.dtype

    wq, bq = params["wq"], params["bq"]
    wk, bk = params["wk"], params["bk"]
    wv, bv = params["wv"], params["bv"]
    wo, bo = params["wo"], params["bo"]

    q_spec = pl.BlockSpec((pl.Squeezed(), tq, D), lambda b, qi: (b, qi, 0))
    # K/V index only on the batch axis: block stays VMEM-resident across q tiles.
    kv_spec = pl.BlockSpec((pl.Squeezed(), S, D), lambda b, qi: (b, 0, 0))
    # Constant blocks: single-buffered (no wasted double-buffer VMEM).
    w_spec = pl.BlockSpec((D, D), lambda b, qi: (0, 0),
                          pipeline_mode=pl.Buffered(1))
    b_spec = pl.BlockSpec((1, D), lambda b, qi: (0, 0),
                          pipeline_mode=pl.Buffered(1))
    out_spec = pl.BlockSpec((pl.Squeezed(), tq, D), lambda b, qi: (b, qi, 0))

    kernel = functools.partial(_mha_kernel, n_heads, d_k, compute_dtype)

    itemsize = jnp.dtype(Q.dtype).itemsize
    # Q/K/V projections once each + output projection: 8*B*S*D^2 FLOPs.
    # Attention (scores + p@v): 4*B*S^2*D FLOPs.  K/V are read once per batch.
    cost = pl.CostEstimate(
        flops=int(8 * B * S * D * D + 4 * B * S * S * D),
        transcendentals=int(B * n_heads * S * S),
        bytes_accessed=int(itemsize * (4 * B * S * D + 4 * D * D + 4 * D)),
    )

    return pl.pallas_call(
        kernel,
        out_shape=jax.ShapeDtypeStruct((B, S, D), Q.dtype),
        grid_spec=pltpu.PrefetchScalarGridSpec(
            num_scalar_prefetch=0,
            grid=(B, num_q_tiles),
            in_specs=[q_spec, kv_spec, kv_spec,
                      w_spec, b_spec, w_spec, b_spec,
                      w_spec, b_spec, w_spec, b_spec],
            out_specs=out_spec,
            scratch_shapes=[
                pltpu.VMEM((S, D), compute_dtype),   # cached K projection
                pltpu.VMEM((S, D), compute_dtype),   # cached V projection
                pltpu.VMEM((tq, D), compute_dtype),  # concatenated head contexts
            ],
        ),
        compiler_params=pltpu.CompilerParams(
            # Batch axis parallel (v7x megacore); q-tile axis must be
            # "arbitrary" so the per-batch K/V projection cache is valid.
            dimension_semantics=("parallel", "arbitrary"),
            vmem_limit_bytes=_vmem_limit_bytes(),
        ),
        cost_estimate=cost,
    )(Q, K, V, wq, bq, wk, bk, wv, bv, wo, bo)


def _reference(Q, K, V, params, *, n_heads):
    """Pure-JAX reference mirroring the PyTorch module (mask=None)."""
    B, S, D = Q.shape
    d_k = D // n_heads

    def lin(x, w, b):
        return x @ w + b

    q = lin(Q, params["wq"], params["bq"]).reshape(B, S, n_heads, d_k).transpose(0, 2, 1, 3)
    k = lin(K, params["wk"], params["bk"]).reshape(B, S, n_heads, d_k).transpose(0, 2, 1, 3)
    v = lin(V, params["wv"], params["bv"]).reshape(B, S, n_heads, d_k).transpose(0, 2, 1, 3)

    scores = jnp.einsum("bhqd,bhkd->bhqk", q, k) / math.sqrt(d_k)
    attn = jax.nn.softmax(scores, axis=-1)
    ctx = jnp.einsum("bhqk,bhkd->bhqd", attn, v)
    ctx = ctx.transpose(0, 2, 1, 3).reshape(B, S, D)
    return lin(ctx, params["wo"], params["bo"])


def _init_params(key, d_model):
    """Deterministic init mimicking nn.Linear (uniform(-1/sqrt(fan_in), ..))."""
    ks = jax.random.split(key, 8)
    bound = 1.0 / math.sqrt(d_model)

    def u(k, shape):
        return jax.random.uniform(k, shape, jnp.float32, -bound, bound)

    # Stored as (D_in, D_out): equivalent to PyTorch weight.T
    return {
        "wq": u(ks[0], (d_model, d_model)), "bq": u(ks[1], (1, d_model)),
        "wk": u(ks[2], (d_model, d_model)), "bk": u(ks[3], (1, d_model)),
        "wv": u(ks[4], (d_model, d_model)), "bv": u(ks[5], (1, d_model)),
        "wo": u(ks[6], (d_model, d_model)), "bo": u(ks[7], (1, d_model)),
    }


if __name__ == "__main__":
    # Small shapes consistent with the module: d_model divisible by n_heads.
    B, S, D, H = 2, 8, 32, 4

    key = jax.random.PRNGKey(0)
    kq, kk, kv, kp = jax.random.split(key, 4)
    Q = jax.random.normal(kq, (B, S, D), jnp.float32)
    K = jax.random.normal(kk, (B, S, D), jnp.float32)
    V = jax.random.normal(kv, (B, S, D), jnp.float32)
    params = _init_params(kp, D)

    out = multi_head_attention(Q, K, V, params, n_heads=H)
    out = jax.block_until_ready(out)

    ref = _reference(Q, K, V, params, n_heads=H)
    assert out.shape == (B, S, D)
    # Tolerance accounts for the EUP approximate reciprocal in the softmax
    # denominator (~1e-3 relative); everything else is f32 for f32 inputs.
    assert jnp.allclose(out, ref, atol=1e-2, rtol=1e-2), "mismatch vs reference"

    print("KERNEL_OK")
</pallas_src>

<mosaic_0001>
module attributes {stable_mosaic.version = 11 : i64} {
  func.func @_mha_kernel(%arg0: i32, %arg1: i32, %arg2: memref<1x8x32xf32, #tpu.memory_space<vmem>>, %arg3: memref<1x8x32xf32, #tpu.memory_space<vmem>>, %arg4: memref<1x8x32xf32, #tpu.memory_space<vmem>>, %arg5: memref<32x32xf32, #tpu.memory_space<vmem>>, %arg6: memref<1x32xf32, #tpu.memory_space<vmem>>, %arg7: memref<32x32xf32, #tpu.memory_space<vmem>>, %arg8: memref<1x32xf32, #tpu.memory_space<vmem>>, %arg9: memref<32x32xf32, #tpu.memory_space<vmem>>, %arg10: memref<1x32xf32, #tpu.memory_space<vmem>>, %arg11: memref<32x32xf32, #tpu.memory_space<vmem>>, %arg12: memref<1x32xf32, #tpu.memory_space<vmem>>, %arg13: memref<1x8x32xf32, #tpu.memory_space<vmem>>, %arg14: memref<8x32xf32, #tpu.memory_space<vmem>>, %arg15: memref<8x32xf32, #tpu.memory_space<vmem>>, %arg16: memref<8x32xf32, #tpu.memory_space<vmem>>) attributes {dimension_semantics = [#tpu.dimension_semantics<parallel>, #tpu.dimension_semantics<arbitrary>], iteration_bounds = array<i64: 2, 1>, scalar_prefetch = 0 : i64, scratch_operands = 3 : i64, tpu.core_type = #tpu.core_type<tc>, window_params = [{transform_indices = @transform_0, window_bounds = array<i64: 1, 8, 32>}, {transform_indices = @transform_1, window_bounds = array<i64: 1, 8, 32>}, {transform_indices = @transform_2, window_bounds = array<i64: 1, 8, 32>}, {pipeline_mode = #tpu.pipeline_mode<synchronous>, transform_indices = @transform_3, window_bounds = array<i64: 32, 32>}, {pipeline_mode = #tpu.pipeline_mode<synchronous>, transform_indices = @transform_4, window_bounds = array<i64: 1, 32>}, {pipeline_mode = #tpu.pipeline_mode<synchronous>, transform_indices = @transform_5, window_bounds = array<i64: 32, 32>}, {pipeline_mode = #tpu.pipeline_mode<synchronous>, transform_indices = @transform_6, window_bounds = array<i64: 1, 32>}, {pipeline_mode = #tpu.pipeline_mode<synchronous>, transform_indices = @transform_7, window_bounds = array<i64: 32, 32>}, {pipeline_mode = #tpu.pipeline_mode<synchronous>, transform_indices = @transform_8, window_bounds = array<i64: 1, 32>}, {pipeline_mode = #tpu.pipeline_mode<synchronous>, transform_indices = @transform_9, window_bounds = array<i64: 32, 32>}, {pipeline_mode = #tpu.pipeline_mode<synchronous>, transform_indices = @transform_10, window_bounds = array<i64: 1, 32>}, {transform_indices = @transform_11, window_bounds = array<i64: 1, 8, 32>}]} {
    %c0_i32 = arith.constant 0 : i32
    %0 = arith.cmpi eq, %arg1, %c0_i32 : i32
    %1 = arith.extui %0 : i1 to i32
    %c0_i32_0 = arith.constant 0 : i32
    %2 = arith.cmpi ne, %1, %c0_i32_0 : i32
    scf.if %2 {
      %c0_43 = arith.constant 0 : index
      %c0_44 = arith.constant 0 : index
      %c0_45 = arith.constant 0 : index
      %87 = vector.load %arg3[%c0_43, %c0_44, %c0_45] : memref<1x8x32xf32, #tpu.memory_space<vmem>>, vector<1x8x32xf32>
      %88 = vector.shape_cast %87 : vector<1x8x32xf32> to vector<8x32xf32>
      %c0_46 = arith.constant 0 : index
      %c0_47 = arith.constant 0 : index
      %89 = vector.load %arg7[%c0_46, %c0_47] : memref<32x32xf32, #tpu.memory_space<vmem>>, vector<32x32xf32>
      %cst_48 = arith.constant dense<0.000000e+00> : vector<8x32xf32>
      %90 = tpu.matmul %88, %89, %cst_48 {dimension_numbers = #tpu.dot_dimension_numbers<[1], [0], [0], [1], [0, 0, 1, 1], [], []>} : vector<8x32xf32>, vector<32x32xf32>, vector<8x32xf32> -> vector<8x32xf32>
      %c0_49 = arith.constant 0 : index
      %c0_50 = arith.constant 0 : index
      %91 = vector.load %arg8[%c0_49, %c0_50] : memref<1x32xf32, #tpu.memory_space<vmem>>, vector<1x32xf32>
      %92 = vector.broadcast %91 : vector<1x32xf32> to vector<8x32xf32>
      %93 = arith.addf %90, %92 : vector<8x32xf32>
      %c0_51 = arith.constant 0 : index
      %c0_52 = arith.constant 0 : index
      %c0_53 = arith.constant 0 : index
      %94 = vector.load %arg4[%c0_51, %c0_52, %c0_53] : memref<1x8x32xf32, #tpu.memory_space<vmem>>, vector<1x8x32xf32>
      %95 = vector.shape_cast %94 : vector<1x8x32xf32> to vector<8x32xf32>
      %c0_54 = arith.constant 0 : index
      %c0_55 = arith.constant 0 : index
      %96 = vector.load %arg9[%c0_54, %c0_55] : memref<32x32xf32, #tpu.memory_space<vmem>>, vector<32x32xf32>
      %cst_56 = arith.constant dense<0.000000e+00> : vector<8x32xf32>
      %97 = tpu.matmul %95, %96, %cst_56 {dimension_numbers = #tpu.dot_dimension_numbers<[1], [0], [0], [1], [0, 0, 1, 1], [], []>} : vector<8x32xf32>, vector<32x32xf32>, vector<8x32xf32> -> vector<8x32xf32>
      %c0_57 = arith.constant 0 : index
      %c0_58 = arith.constant 0 : index
      %98 = vector.load %arg10[%c0_57, %c0_58] : memref<1x32xf32, #tpu.memory_space<vmem>>, vector<1x32xf32>
      %99 = vector.broadcast %98 : vector<1x32xf32> to vector<8x32xf32>
      %100 = arith.addf %97, %99 : vector<8x32xf32>
      %c0_59 = arith.constant 0 : index
      %c0_60 = arith.constant 0 : index
      %101 = vector.load %arg14[%c0_59, %c0_60] : memref<8x32xf32, #tpu.memory_space<vmem>>, vector<8x32xf32>
      tpu.vector_store %arg14[%c0_59, %c0_60], %93 {strides = array<i32>} : memref<8x32xf32, #tpu.memory_space<vmem>>, vector<8x32xf32>,
      %c0_61 = arith.constant 0 : index
      %c0_62 = arith.constant 0 : index
      %102 = vector.load %arg15[%c0_61, %c0_62] : memref<8x32xf32, #tpu.memory_space<vmem>>, vector<8x32xf32>
      tpu.vector_store %arg15[%c0_61, %c0_62], %100 {strides = array<i32>} : memref<8x32xf32, #tpu.memory_space<vmem>>, vector<8x32xf32>,
    } else {
    }
    %c0 = arith.constant 0 : index
    %c0_1 = arith.constant 0 : index
    %c0_2 = arith.constant 0 : index
    %3 = vector.load %arg2[%c0, %c0_1, %c0_2] : memref<1x8x32xf32, #tpu.memory_space<vmem>>, vector<1x8x32xf32>
    %4 = vector.shape_cast %3 : vector<1x8x32xf32> to vector<8x32xf32>
    %c0_3 = arith.constant 0 : index
    %c0_4 = arith.constant 0 : index
    %5 = vector.load %arg5[%c0_3, %c0_4] : memref<32x32xf32, #tpu.memory_space<vmem>>, vector<32x32xf32>
    %cst = arith.constant dense<0.000000e+00> : vector<8x32xf32>
    %6 = tpu.matmul %4, %5, %cst {dimension_numbers = #tpu.dot_dimension_numbers<[1], [0], [0], [1], [0, 0, 1, 1], [], []>} : vector<8x32xf32>, vector<32x32xf32>, vector<8x32xf32> -> vector<8x32xf32>
    %c0_5 = arith.constant 0 : index
    %c0_6 = arith.constant 0 : index
    %7 = vector.load %arg6[%c0_5, %c0_6] : memref<1x32xf32, #tpu.memory_space<vmem>>, vector<1x32xf32>
    %8 = vector.broadcast %7 : vector<1x32xf32> to vector<8x32xf32>
    %9 = arith.addf %6, %8 : vector<8x32xf32>
    %cst_7 = arith.constant 0.353553385 : f32
    %10 = vector.broadcast %cst_7 : f32 to vector<8x32xf32>
    %11 = arith.mulf %9, %10 : vector<8x32xf32>
    %c0_8 = arith.constant 0 : index
    %c0_9 = arith.constant 0 : index
    %12 = vector.load %arg14[%c0_8, %c0_9] : memref<8x32xf32, #tpu.memory_space<vmem>>, vector<8x32xf32>
    %c0_10 = arith.constant 0 : index
    %c0_11 = arith.constant 0 : index
    %13 = vector.load %arg15[%c0_10, %c0_11] : memref<8x32xf32, #tpu.memory_space<vmem>>, vector<8x32xf32>
    %14 = vector.extract_strided_slice %11 {offsets = [0, 0], sizes = [8, 8], strides = [1, 1]} : vector<8x32xf32> to vector<8x8xf32>
    %15 = vector.extract_strided_slice %12 {offsets = [0, 0], sizes = [8, 8], strides = [1, 1]} : vector<8x32xf32> to vector<8x8xf32>
    %16 = vector.extract_strided_slice %13 {offsets = [0, 0], sizes = [8, 8], strides = [1, 1]} : vector<8x32xf32> to vector<8x8xf32>
    %cst_12 = arith.constant dense<0.000000e+00> : vector<8x8xf32>
    %17 = tpu.matmul %14, %15, %cst_12 {dimension_numbers = #tpu.dot_dimension_numbers<[1], [1], [0], [0], [0, 0, 1, 0], [], []>} : vector<8x8xf32>, vector<8x8xf32>, vector<8x8xf32> -> vector<8x8xf32>
    %cst_13 = arith.constant dense<0xFF800000> : vector<8xf32>
    %18 = vector.multi_reduction <maximumf>, %17, %cst_13 [1] : vector<8x8xf32> to vector<8xf32>
    %19 = vector.shape_cast %18 : vector<8xf32> to vector<8x1xf32>
    %20 = vector.broadcast %19 : vector<8x1xf32> to vector<8x8xf32>
    %21 = arith.subf %17, %20 : vector<8x8xf32>
    %22 = math.exp %21 : vector<8x8xf32>
    %cst_14 = arith.constant dense<0.000000e+00> : vector<8xf32>
    %23 = vector.multi_reduction <add>, %22, %cst_14 [1] : vector<8x8xf32> to vector<8xf32>
    %24 = vector.shape_cast %23 : vector<8xf32> to vector<8x1xf32>
    %25 = tpu.reciprocal %24 {approx = true} : vector<8x1xf32> -> vector<8x1xf32>
    %26 = vector.broadcast %25 : vector<8x1xf32> to vector<8x8xf32>
    %27 = arith.mulf %22, %26 : vector<8x8xf32>
    %cst_15 = arith.constant dense<0.000000e+00> : vector<8x8xf32>
    %28 = tpu.matmul %27, %16, %cst_15 {dimension_numbers = #tpu.dot_dimension_numbers<[1], [0], [0], [1], [0, 0, 1, 1], [], []>} : vector<8x8xf32>, vector<8x8xf32>, vector<8x8xf32> -> vector<8x8xf32>
    %c0_16 = arith.constant 0 : index
    %c0_17 = arith.constant 0 : index
    %29 = vector.load %arg16[%c0_16, %c0_17] : memref<8x32xf32, #tpu.memory_space<vmem>>, vector<8x8xf32>
    tpu.vector_store %arg16[%c0_16, %c0_17], %28 {strides = array<i32>} : memref<8x32xf32, #tpu.memory_space<vmem>>, vector<8x8xf32>,
    %30 = vector.extract_strided_slice %11 {offsets = [0, 8], sizes = [8, 8], strides = [1, 1]} : vector<8x32xf32> to vector<8x8xf32>
    %31 = vector.extract_strided_slice %12 {offsets = [0, 8], sizes = [8, 8], strides = [1, 1]} : vector<8x32xf32> to vector<8x8xf32>
    %32 = vector.extract_strided_slice %13 {offsets = [0, 8], sizes = [8, 8], strides = [1, 1]} : vector<8x32xf32> to vector<8x8xf32>
    %cst_18 = arith.constant dense<0.000000e+00> : vector<8x8xf32>
    %33 = tpu.matmul %30, %31, %cst_18 {dimension_numbers = #tpu.dot_dimension_numbers<[1], [1], [0], [0], [0, 0, 1, 0], [], []>} : vector<8x8xf32>, vector<8x8xf32>, vector<8x8xf32> -> vector<8x8xf32>
    %cst_19 = arith.constant dense<0xFF800000> : vector<8xf32>
    %34 = vector.multi_reduction <maximumf>, %33, %cst_19 [1] : vector<8x8xf32> to vector<8xf32>
    %35 = vector.shape_cast %34 : vector<8xf32> to vector<8x1xf32>
    %36 = vector.broadcast %35 : vector<8x1xf32> to vector<8x8xf32>
    %37 = arith.subf %33, %36 : vector<8x8xf32>
    %38 = math.exp %37 : vector<8x8xf32>
    %cst_20 = arith.constant dense<0.000000e+00> : vector<8xf32>
    %39 = vector.multi_reduction <add>, %38, %cst_20 [1] : vector<8x8xf32> to vector<8xf32>
    %40 = vector.shape_cast %39 : vector<8xf32> to vector<8x1xf32>
    %41 = tpu.reciprocal %40 {approx = true} : vector<8x1xf32> -> vector<8x1xf32>
    %42 = vector.broadcast %41 : vector<8x1xf32> to vector<8x8xf32>
    %43 = arith.mulf %38, %42 : vector<8x8xf32>
    %cst_21 = arith.constant dense<0.000000e+00> : vector<8x8xf32>
    %44 = tpu.matmul %43, %32, %cst_21 {dimension_numbers = #tpu.dot_dimension_numbers<[1], [0], [0], [1], [0, 0, 1, 1], [], []>} : vector<8x8xf32>, vector<8x8xf32>, vector<8x8xf32> -> vector<8x8xf32>
    %c0_22 = arith.constant 0 : index
    %c8 = arith.constant 8 : index
    %45 = vector.load %arg16[%c0_22, %c8] : memref<8x32xf32, #tpu.memory_space<vmem>>, vector<8x8xf32>
    tpu.vector_store %arg16[%c0_22, %c8], %44 {strides = array<i32>} : memref<8x32xf32, #tpu.memory_space<vmem>>, vector<8x8xf32>,
    %46 = vector.extract_strided_slice %11 {offsets = [0, 16], sizes = [8, 8], strides = [1, 1]} : vector<8x32xf32> to vector<8x8xf32>
    %47 = vector.extract_strided_slice %12 {offsets = [0, 16], sizes = [8, 8], strides = [1, 1]} : vector<8x32xf32> to vector<8x8xf32>
    %48 = vector.extract_strided_slice %13 {offsets = [0, 16], sizes = [8, 8], strides = [1, 1]} : vector<8x32xf32> to vector<8x8xf32>
    %cst_23 = arith.constant dense<0.000000e+00> : vector<8x8xf32>
    %49 = tpu.matmul %46, %47, %cst_23 {dimension_numbers = #tpu.dot_dimension_numbers<[1], [1], [0], [0], [0, 0, 1, 0], [], []>} : vector<8x8xf32>, vector<8x8xf32>, vector<8x8xf32> -> vector<8x8xf32>
    %cst_24 = arith.constant dense<0xFF800000> : vector<8xf32>
    %50 = vector.multi_reduction <maximumf>, %49, %cst_24 [1] : vector<8x8xf32> to vector<8xf32>
    %51 = vector.shape_cast %50 : vector<8xf32> to vector<8x1xf32>
    %52 = vector.broadcast %51 : vector<8x1xf32> to vector<8x8xf32>
    %53 = arith.subf %49, %52 : vector<8x8xf32>
    %54 = math.exp %53 : vector<8x8xf32>
    %cst_25 = arith.constant dense<0.000000e+00> : vector<8xf32>
    %55 = vector.multi_reduction <add>, %54, %cst_25 [1] : vector<8x8xf32> to vector<8xf32>
    %56 = vector.shape_cast %55 : vector<8xf32> to vector<8x1xf32>
    %57 = tpu.reciprocal %56 {approx = true} : vector<8x1xf32> -> vector<8x1xf32>
    %58 = vector.broadcast %57 : vector<8x1xf32> to vector<8x8xf32>
    %59 = arith.mulf %54, %58 : vector<8x8xf32>
    %cst_26 = arith.constant dense<0.000000e+00> : vector<8x8xf32>
    %60 = tpu.matmul %59, %48, %cst_26 {dimension_numbers = #tpu.dot_dimension_numbers<[1], [0], [0], [1], [0, 0, 1, 1], [], []>} : vector<8x8xf32>, vector<8x8xf32>, vector<8x8xf32> -> vector<8x8xf32>
    %c0_27 = arith.constant 0 : index
    %c16 = arith.constant 16 : index
    %61 = vector.load %arg16[%c0_27, %c16] : memref<8x32xf32, #tpu.memory_space<vmem>>, vector<8x8xf32>
    tpu.vector_store %arg16[%c0_27, %c16], %60 {strides = array<i32>} : memref<8x32xf32, #tpu.memory_space<vmem>>, vector<8x8xf32>,
    %62 = vector.extract_strided_slice %11 {offsets = [0, 24], sizes = [8, 8], strides = [1, 1]} : vector<8x32xf32> to vector<8x8xf32>
    %63 = vector.extract_strided_slice %12 {offsets = [0, 24], sizes = [8, 8], strides = [1, 1]} : vector<8x32xf32> to vector<8x8xf32>
    %64 = vector.extract_strided_slice %13 {offsets = [0, 24], sizes = [8, 8], strides = [1, 1]} : vector<8x32xf32> to vector<8x8xf32>
    %cst_28 = arith.constant dense<0.000000e+00> : vector<8x8xf32>
    %65 = tpu.matmul %62, %63, %cst_28 {dimension_numbers = #tpu.dot_dimension_numbers<[1], [1], [0], [0], [0, 0, 1, 0], [], []>} : vector<8x8xf32>, vector<8x8xf32>, vector<8x8xf32> -> vector<8x8xf32>
    %cst_29 = arith.constant dense<0xFF800000> : vector<8xf32>
    %66 = vector.multi_reduction <maximumf>, %65, %cst_29 [1] : vector<8x8xf32> to vector<8xf32>
    %67 = vector.shape_cast %66 : vector<8xf32> to vector<8x1xf32>
    %68 = vector.broadcast %67 : vector<8x1xf32> to vector<8x8xf32>
    %69 = arith.subf %65, %68 : vector<8x8xf32>
    %70 = math.exp %69 : vector<8x8xf32>
    %cst_30 = arith.constant dense<0.000000e+00> : vector<8xf32>
    %71 = vector.multi_reduction <add>, %70, %cst_30 [1] : vector<8x8xf32> to vector<8xf32>
    %72 = vector.shape_cast %71 : vector<8xf32> to vector<8x1xf32>
    %73 = tpu.reciprocal %72 {approx = true} : vector<8x1xf32> -> vector<8x1xf32>
    %74 = vector.broadcast %73 : vector<8x1xf32> to vector<8x8xf32>
    %75 = arith.mulf %70, %74 : vector<8x8xf32>
    %cst_31 = arith.constant dense<0.000000e+00> : vector<8x8xf32>
    %76 = tpu.matmul %75, %64, %cst_31 {dimension_numbers = #tpu.dot_dimension_numbers<[1], [0], [0], [1], [0, 0, 1, 1], [], []>} : vector<8x8xf32>, vector<8x8xf32>, vector<8x8xf32> -> vector<8x8xf32>
    %c0_32 = arith.constant 0 : index
    %c24 = arith.constant 24 : index
    %77 = vector.load %arg16[%c0_32, %c24] : memref<8x32xf32, #tpu.memory_space<vmem>>, vector<8x8xf32>
    tpu.vector_store %arg16[%c0_32, %c24], %76 {strides = array<i32>} : memref<8x32xf32, #tpu.memory_space<vmem>>, vector<8x8xf32>,
    %c0_33 = arith.constant 0 : index
    %c0_34 = arith.constant 0 : index
    %78 = vector.load %arg16[%c0_33, %c0_34] : memref<8x32xf32, #tpu.memory_space<vmem>>, vector<8x32xf32>
    %c0_35 = arith.constant 0 : index
    %c0_36 = arith.constant 0 : index
    %79 = vector.load %arg11[%c0_35, %c0_36] : memref<32x32xf32, #tpu.memory_space<vmem>>, vector<32x32xf32>
    %cst_37 = arith.constant dense<0.000000e+00> : vector<8x32xf32>
    %80 = tpu.matmul %78, %79, %cst_37 {dimension_numbers = #tpu.dot_dimension_numbers<[1], [0], [0], [1], [0, 0, 1, 1], [], []>} : vector<8x32xf32>, vector<32x32xf32>, vector<8x32xf32> -> vector<8x32xf32>
    %c0_38 = arith.constant 0 : index
    %c0_39 = arith.constant 0 : index
    %81 = vector.load %arg12[%c0_38, %c0_39] : memref<1x32xf32, #tpu.memory_space<vmem>>, vector<1x32xf32>
    %82 = vector.broadcast %81 : vector<1x32xf32> to vector<8x32xf32>
    %83 = arith.addf %80, %82 : vector<8x32xf32>
    %c0_40 = arith.constant 0 : index
    %c0_41 = arith.constant 0 : index
    %c0_42 = arith.constant 0 : index
    %84 = vector.load %arg13[%c0_40, %c0_41, %c0_42] : memref<1x8x32xf32, #tpu.memory_space<vmem>>, vector<1x8x32xf32>
    %85 = vector.shape_cast %84 : vector<1x8x32xf32> to vector<8x32xf32>
    %86 = vector.shape_cast %83 : vector<8x32xf32> to vector<1x8x32xf32>
    tpu.vector_store %arg13[%c0_40, %c0_41, %c0_42], %86 {strides = array<i32>} : memref<1x8x32xf32, #tpu.memory_space<vmem>>, vector<1x8x32xf32>,
    return
  }
  func.func @transform_0(%arg0: i32, %arg1: i32) -> (i32, i32, i32) {
    %c0_i32 = arith.constant 0 : i32
    %c0_i32_0 = arith.constant 0 : i32
    return %arg0, %arg1, %c0_i32 : i32, i32, i32
  }
  func.func @transform_1(%arg0: i32, %arg1: i32) -> (i32, i32, i32) {
    %c0_i32 = arith.constant 0 : i32
    %c0_i32_0 = arith.constant 0 : i32
    %c0_i32_1 = arith.constant 0 : i32
    return %arg0, %c0_i32, %c0_i32_0 : i32, i32, i32
  }
  func.func @transform_2(%arg0: i32, %arg1: i32) -> (i32, i32, i32) {
    %c0_i32 = arith.constant 0 : i32
    %c0_i32_0 = arith.constant 0 : i32
    %c0_i32_1 = arith.constant 0 : i32
    return %arg0, %c0_i32, %c0_i32_0 : i32, i32, i32
  }
  func.func @transform_3(%arg0: i32, %arg1: i32) -> (i32, i32) {
    %c0_i32 = arith.constant 0 : i32
    %c0_i32_0 = arith.constant 0 : i32
    %c0_i32_1 = arith.constant 0 : i32
    return %c0_i32, %c0_i32_0 : i32, i32
  }
  func.func @transform_4(%arg0: i32, %arg1: i32) -> (i32, i32) {
    %c0_i32 = arith.constant 0 : i32
    %c0_i32_0 = arith.constant 0 : i32
    %c0_i32_1 = arith.constant 0 : i32
    return %c0_i32, %c0_i32_0 : i32, i32
  }
  func.func @transform_5(%arg0: i32, %arg1: i32) -> (i32, i32) {
    %c0_i32 = arith.constant 0 : i32
    %c0_i32_0 = arith.constant 0 : i32
    %c0_i32_1 = arith.constant 0 : i32
    return %c0_i32, %c0_i32_0 : i32, i32
  }
  func.func @transform_6(%arg0: i32, %arg1: i32) -> (i32, i32) {
    %c0_i32 = arith.constant 0 : i32
    %c0_i32_0 = arith.constant 0 : i32
    %c0_i32_1 = arith.constant 0 : i32
    return %c0_i32, %c0_i32_0 : i32, i32
  }
  func.func @transform_7(%arg0: i32, %arg1: i32) -> (i32, i32) {
    %c0_i32 = arith.constant 0 : i32
    %c0_i32_0 = arith.constant 0 : i32
    %c0_i32_1 = arith.constant 0 : i32
    return %c0_i32, %c0_i32_0 : i32, i32
  }
  func.func @transform_8(%arg0: i32, %arg1: i32) -> (i32, i32) {
    %c0_i32 = arith.constant 0 : i32
    %c0_i32_0 = arith.constant 0 : i32
    %c0_i32_1 = arith.constant 0 : i32
    return %c0_i32, %c0_i32_0 : i32, i32
  }
  func.func @transform_9(%arg0: i32, %arg1: i32) -> (i32, i32) {
    %c0_i32 = arith.constant 0 : i32
    %c0_i32_0 = arith.constant 0 : i32
    %c0_i32_1 = arith.constant 0 : i32
    return %c0_i32, %c0_i32_0 : i32, i32
  }
  func.func @transform_10(%arg0: i32, %arg1: i32) -> (i32, i32) {
    %c0_i32 = arith.constant 0 : i32
    %c0_i32_0 = arith.constant 0 : i32
    %c0_i32_1 = arith.constant 0 : i32
    return %c0_i32, %c0_i32_0 : i32, i32
  }
  func.func @transform_11(%arg0: i32, %arg1: i32) -> (i32, i32, i32) {
    %c0_i32 = arith.constant 0 : i32
    %c0_i32_0 = arith.constant 0 : i32
    return %arg0, %arg1, %c0_i32 : i32, i32, i32
  }
}

</mosaic_0001>

<llo_original>
// kernel: tpu_custom_call.1
$region0: #{tpu_custom_call.1}
  #allocation0 [shape = 'u32[]', space=smem, size = 0x4, offset = 0x4, fixed_abs, tag = 'smem constant byte address 0x4 - core index']
  #allocation1 [shape = 'u32[72,128]{1,0:T(1,128)}', space=vmem, size = 0x9000, scoped, tag = 'internal scratch']
  #allocation2 [shape = 'f32[8,32]{1,0:T(8,128)}', space=vmem, size = 0x1000, scoped, tag = 'scratch operand']
  #allocation3 [shape = 'f32[8,32]{1,0:T(8,128)}', space=vmem, size = 0x1000, scoped, tag = 'scratch operand']
  #allocation4 [shape = 'f32[8,32]{1,0:T(8,128)}', space=vmem, size = 0x1000, scoped, tag = 'scratch operand']
  %s0 = inlined_call_operand.hbm [shape: f32[2,8,32], index: 0, kind: input, shape index: {}]
  %s1 = inlined_call_operand.hbm [shape: f32[2,8,32], index: 1, kind: input, shape index: {}]
  %s2 = inlined_call_operand.hbm [shape: f32[2,8,32], index: 2, kind: input, shape index: {}]
  %s3 = inlined_call_operand.hbm [shape: f32[32,32], index: 3, kind: input, shape index: {}]
  %s4 = inlined_call_operand.vmem [shape: f32[1,32], index: 4, kind: input, shape index: {}]
  %s5 = inlined_call_operand.hbm [shape: f32[32,32], index: 5, kind: input, shape index: {}]
  %s6 = inlined_call_operand.vmem [shape: f32[1,32], index: 6, kind: input, shape index: {}]
  %s7 = inlined_call_operand.hbm [shape: f32[32,32], index: 7, kind: input, shape index: {}]
  %s8 = inlined_call_operand.vmem [shape: f32[1,32], index: 8, kind: input, shape index: {}]
  %s9 = inlined_call_operand.hbm [shape: f32[32,32], index: 9, kind: input, shape index: {}]
  %s10 = inlined_call_operand.vmem [shape: f32[1,32], index: 10, kind: input, shape index: {}]
  %s11 = inlined_call_operand.hbm [shape: f32[2,8,32], index: 11, kind: output, shape index: {}]
  %s12 = sld [smem:[#allocation0]]
  $region109: #{tpu_custom_call.1} parent=0
    _
  %s14 = ssub.s32 1, %s12
  %s15 = scalar_select 0, %s14, %s12
  $region1: #{tpu_custom_call.1} parent=0
    #allocation5 [shape = 'u8[8192]{0}', space=vmem, size = 0x2000, scoped, tag = 'input window, operand 0']
    #allocation6 [shape = 's32[2]{0}', space=sflag, size = 0x8, scoped, tag = 'scoped memory for tpu_custom_call.1']
    #allocation7 [shape = 's32[2]{0}', space=sflag, size = 0x8, scoped, tag = 'scoped memory for tpu_custom_call.1']
    #allocation8 [shape = 'u8[8192]{0}', space=vmem, size = 0x2000, scoped, tag = 'input window, operand 1']
    #allocation9 [shape = 's32[2]{0}', space=sflag, size = 0x8, scoped, tag = 'scoped memory for tpu_custom_call.1']
    #allocation10 [shape = 'u8[8192]{0}', space=vmem, size = 0x2000, scoped, tag = 'input window, operand 2']
    #allocation11 [shape = 'u8[16384]{0}', space=vmem, size = 0x4000, scoped, tag = 'input window, operand 3, single buffered']
    #allocation12 [shape = 's32[1]{0}', space=sflag, size = 0x4, scoped, tag = 'scoped memory for tpu_custom_call.1']
    #allocation13 [shape = 'u8[16384]{0}', space=vmem, size = 0x4000, scoped, tag = 'input window, operand 5, single buffered']
    #allocation14 [shape = 'u8[16384]{0}', space=vmem, size = 0x4000, scoped, tag = 'input window, operand 7, single buffered']
    #allocation15 [shape = 's32[1]{0}', space=sflag, size = 0x4, scoped, tag = 'scoped memory for tpu_custom_call.1']
    #allocation16 [shape = 'u8[16384]{0}', space=vmem, size = 0x4000, scoped, tag = 'input window, operand 9, single buffered']
    #allocation17 [shape = 'u8[8192]{0}', space=vmem, size = 0x2000, scoped, tag = 'output window, operand 0']
    %16 = vsyncpa [#allocation6], 0
    %s17 = scalar_lea.sflag [#allocation6], 1
    %18 = vsyncpa %s17, 0
    %19 = vsyncpa [#allocation9], 0
    %s20 = scalar_lea.sflag [#allocation9], 1
    %21 = vsyncpa %s20, 0
    %22 = vsyncpa [#allocation12], 0
    %23 = vsyncpa [#allocation15], 0
    %24 = vsyncpa [#allocation7], 0
    %s25 = scalar_lea.sflag [#allocation7], 1
    %26 = vsyncpa %s25, 0
    loop: start=0, step=1, limit=4
    $region2: #{tpu_custom_call.1} parent=1 // loop_pre_header
      _
    $region3: #{tpu_custom_call.1} parent=1 // loop_header
      %s28 = sphi 0, %s32
      %p29 = scmp.ge.s32.totalorder %s28, 4
      %s35 = sphi 0, %s47
      %s36 = sphi 0, %s43
      %s37 = sphi 0, %s35
      %s38 = sphi 0, %s36
      %s39 = sphi 0, %s37
      %s40 = sphi 0, %s38
      %s52 = sphi 0, %s54
      %s55 = sphi 0, %s52
      %s56 = sphi 0, %s55
      %s72 = sphi 0, %s56
      %s78 = sphi 0, %s80
      %s81 = sphi 0, %s78
      %s82 = sphi 0, %s81
      %s98 = sphi 0, %s82
      %s104 = sphi 0, %s106
      %s107 = sphi 0, %s104
      %s108 = sphi 0, %s107
      %s124 = sphi 0, %s108
      %s128 = sphi 0, %s128
      %s130 = sphi 0, %s128
      %s131 = sphi 0, %s130
      %s145 = sphi 0, %s131
      %s149 = sphi 0, %s149
      %s151 = sphi 0, %s149
      %s152 = sphi 0, %s151
      %s166 = sphi 0, %s152
      %s170 = sphi 0, %s170
      %s172 = sphi 0, %s170
      %s173 = sphi 0, %s172
      %s187 = sphi 0, %s173
      %s191 = sphi 0, %s191
      %s193 = sphi 0, %s191
      %s194 = sphi 0, %s193
      %s208 = sphi 0, %s194
      %s212 = sphi 0, %s212
      %s214 = sphi 0, %s212
      %s215 = sphi 0, %s214
      %s229 = sphi 0, %s215
      %s233 = sphi 0, %s233
      %s235 = sphi 0, %s233
      %s236 = sphi 0, %s235
      %s250 = sphi 0, %s236
      %s254 = sphi 0, %s254
      %s256 = sphi 0, %s254
      %s257 = sphi 0, %s256
      %s271 = sphi 0, %s257
      %s275 = sphi 0, %s275
      %s277 = sphi 0, %s275
      %s278 = sphi 0, %s277
      %s292 = sphi 0, %s278
      %s300 = sphi 0, %s302
      %s303 = sphi 0, %s300
      %s304 = sphi 0, %s303
      %s320 = sphi 0, %s304
    $region4: #{tpu_custom_call.1} parent=1 // loop_header_branch
      %31 = sbr.rel (%p29) target = $region8
    $region5: #{tpu_custom_call.1} parent=1 // loop_body
      %s33 = ssub.s32 %s28, 1
      %s34 = ssub.s32 %s28, 2
      %s41 = sadd.s32 1, %s36
      %p42 = scmp.ge.s32.totalorder %s41, 1
      %s43 = scalar_select %p42, 0, %s41
      %s44 = sadd.s32 1, %s35
      %s45 = scalar_select %p42, %s44, %s35
      %p46 = scmp.ge.s32.totalorder %s45, 2
      %s47 = scalar_select %p46, 0, %s45
      %s48 = ssub.s32 %s35, %s47
      %s49 = ssub.s32 %s36, %s43
      %s50 = sor.u32 %s48, %s49
      %p51 = scmp.eq.s32.totalorder %s50, 0
      %s53 = sadd.s32 %s52, 1
      %s54 = scalar_select %p51, %s52, %s53
      %p57 = pneg %p51
      %p58 = scmp.eq.s32.totalorder %s28, 1
      %p59 = por %p57, %p58
      %p60 = scmp.ne.s32.totalorder %s52, %s55
      %p61 = scmp.eq.s32.totalorder %s28, 0
      %p62 = por %p60, %p61
      %p63 = scmp.ne.s32.totalorder %s52, %s55
      %p64 = scmp.eq.s32.totalorder %s33, 1
      %p65 = por %p63, %p64
      %p66 = scmp.ne.s32.totalorder %s55, %s56
      %p67 = scmp.eq.s32.totalorder %s33, 0
      %p68 = por %p66, %p67
      %p69 = scmp.ne.s32.totalorder %s55, %s56
      %p70 = scmp.eq.s32.totalorder %s34, 1
      %p71 = por %p69, %p70
      %p73 = scmp.ne.s32.totalorder %s56, %s72
      %p74 = scmp.eq.s32.totalorder %s34, 0
      %p75 = por %p73, %p74
      %s76 = ssub.s32 %s35, %s47
      %p77 = scmp.eq.s32.totalorder %s76, 0
      %s79 = sadd.s32 %s78, 1
      %s80 = scalar_select %p77, %s78, %s79
      %p83 = pneg %p77
      %p84 = scmp.eq.s32.totalorder %s28, 1
      %p85 = por %p83, %p84
      %p86 = scmp.ne.s32.totalorder %s78, %s81
      %p87 = scmp.eq.s32.totalorder %s28, 0
      %p88 = por %p86, %p87
      %p89 = scmp.ne.s32.totalorder %s78, %s81
      %p90 = scmp.eq.s32.totalorder %s33, 1
      %p91 = por %p89, %p90
      %p92 = scmp.ne.s32.totalorder %s81, %s82
      %p93 = scmp.eq.s32.totalorder %s33, 0
      %p94 = por %p92, %p93
      %p95 = scmp.ne.s32.totalorder %s81, %s82
      %p96 = scmp.eq.s32.totalorder %s34, 1
      %p97 = por %p95, %p96
      %p99 = scmp.ne.s32.totalorder %s82, %s98
      %p100 = scmp.eq.s32.totalorder %s34, 0
      %p101 = por %p99, %p100
      %s102 = ssub.s32 %s35, %s47
      %p103 = scmp.eq.s32.totalorder %s102, 0
      %s105 = sadd.s32 %s104, 1
      %s106 = scalar_select %p103, %s104, %s105
      %p109 = pneg %p103
      %p110 = scmp.eq.s32.totalorder %s28, 1
      %p111 = por %p109, %p110
      %p112 = scmp.ne.s32.totalorder %s104, %s107
      %p113 = scmp.eq.s32.totalorder %s28, 0
      %p114 = por %p112, %p113
      %p115 = scmp.ne.s32.totalorder %s104, %s107
      %p116 = scmp.eq.s32.totalorder %s33, 1
      %p117 = por %p115, %p116
      %p118 = scmp.ne.s32.totalorder %s107, %s108
      %p119 = scmp.eq.s32.totalorder %s33, 0
      %p120 = por %p118, %p119
      %p121 = scmp.ne.s32.totalorder %s107, %s108
      %p122 = scmp.eq.s32.totalorder %s34, 1
      %p123 = por %p121, %p122
      %p125 = scmp.ne.s32.totalorder %s108, %s124
      %p126 = scmp.eq.s32.totalorder %s34, 0
      %p127 = por %p125, %p126
      %s129 = sadd.s32 %s128, 1
      %p132 = scmp.eq.s32.totalorder %s28, 1
      %p133 = scmp.ne.s32.totalorder %s128, %s130
      %p134 = scmp.eq.s32.totalorder %s28, 0
      %p135 = por %p133, %p134
      %p136 = scmp.ne.s32.totalorder %s128, %s130
      %p137 = scmp.eq.s32.totalorder %s33, 1
      %p138 = por %p136, %p137
      %p139 = scmp.ne.s32.totalorder %s130, %s131
      %p140 = scmp.eq.s32.totalorder %s33, 0
      %p141 = por %p139, %p140
      %p142 = scmp.ne.s32.totalorder %s130, %s131
      %p143 = scmp.eq.s32.totalorder %s34, 1
      %p144 = por %p142, %p143
      %p146 = scmp.ne.s32.totalorder %s131, %s145
      %p147 = scmp.eq.s32.totalorder %s34, 0
      %p148 = por %p146, %p147
      %s150 = sadd.s32 %s149, 1
      %p153 = scmp.eq.s32.totalorder %s28, 1
      %p154 = scmp.ne.s32.totalorder %s149, %s151
      %p155 = scmp.eq.s32.totalorder %s28, 0
      %p156 = por %p154, %p155
      %p157 = scmp.ne.s32.totalorder %s149, %s151
      %p158 = scmp.eq.s32.totalorder %s33, 1
      %p159 = por %p157, %p158
      %p160 = scmp.ne.s32.totalorder %s151, %s152
      %p161 = scmp.eq.s32.totalorder %s33, 0
      %p162 = por %p160, %p161
      %p163 = scmp.ne.s32.totalorder %s151, %s152
      %p164 = scmp.eq.s32.totalorder %s34, 1
      %p165 = por %p163, %p164
      %p167 = scmp.ne.s32.totalorder %s152, %s166
      %p168 = scmp.eq.s32.totalorder %s34, 0
      %p169 = por %p167, %p168
      %s171 = sadd.s32 %s170, 1
      %p174 = scmp.eq.s32.totalorder %s28, 1
      %p175 = scmp.ne.s32.totalorder %s170, %s172
      %p176 = scmp.eq.s32.totalorder %s28, 0
      %p177 = por %p175, %p176
      %p178 = scmp.ne.s32.totalorder %s170, %s172
      %p179 = scmp.eq.s32.totalorder %s33, 1
      %p180 = por %p178, %p179
      %p181 = scmp.ne.s32.totalorder %s172, %s173
      %p182 = scmp.eq.s32.totalorder %s33, 0
      %p183 = por %p181, %p182
      %p184 = scmp.ne.s32.totalorder %s172, %s173
      %p185 = scmp.eq.s32.totalorder %s34, 1
      %p186 = por %p184, %p185
      %p188 = scmp.ne.s32.totalorder %s173, %s187
      %p189 = scmp.eq.s32.totalorder %s34, 0
      %p190 = por %p188, %p189
      %s192 = sadd.s32 %s191, 1
      %p195 = scmp.eq.s32.totalorder %s28, 1
      %p196 = scmp.ne.s32.totalorder %s191, %s193
      %p197 = scmp.eq.s32.totalorder %s28, 0
      %p198 = por %p196, %p197
      %p199 = scmp.ne.s32.totalorder %s191, %s193
      %p200 = scmp.eq.s32.totalorder %s33, 1
      %p201 = por %p199, %p200
      %p202 = scmp.ne.s32.totalorder %s193, %s194
      %p203 = scmp.eq.s32.totalorder %s33, 0
      %p204 = por %p202, %p203
      %p205 = scmp.ne.s32.totalorder %s193, %s194
      %p206 = scmp.eq.s32.totalorder %s34, 1
      %p207 = por %p205, %p206
      %p209 = scmp.ne.s32.totalorder %s194, %s208
      %p210 = scmp.eq.s32.totalorder %s34, 0
      %p211 = por %p209, %p210
      %s213 = sadd.s32 %s212, 1
      %p216 = scmp.eq.s32.totalorder %s28, 1
      %p217 = scmp.ne.s32.totalorder %s212, %s214
      %p218 = scmp.eq.s32.totalorder %s28, 0
      %p219 = por %p217, %p218
      %p220 = scmp.ne.s32.totalorder %s212, %s214
      %p221 = scmp.eq.s32.totalorder %s33, 1
      %p222 = por %p220, %p221
      %p223 = scmp.ne.s32.totalorder %s214, %s215
      %p224 = scmp.eq.s32.totalorder %s33, 0
      %p225 = por %p223, %p224
      %p226 = scmp.ne.s32.totalorder %s214, %s215
      %p227 = scmp.eq.s32.totalorder %s34, 1
      %p228 = por %p226, %p227
      %p230 = scmp.ne.s32.totalorder %s215, %s229
      %p231 = scmp.eq.s32.totalorder %s34, 0
      %p232 = por %p230, %p231
      %s234 = sadd.s32 %s233, 1
      %p237 = scmp.eq.s32.totalorder %s28, 1
      %p238 = scmp.ne.s32.totalorder %s233, %s235
      %p239 = scmp.eq.s32.totalorder %s28, 0
      %p240 = por %p238, %p239
      %p241 = scmp.ne.s32.totalorder %s233, %s235
      %p242 = scmp.eq.s32.totalorder %s33, 1
      %p243 = por %p241, %p242
      %p244 = scmp.ne.s32.totalorder %s235, %s236
      %p245 = scmp.eq.s32.totalorder %s33, 0
      %p246 = por %p244, %p245
      %p247 = scmp.ne.s32.totalorder %s235, %s236
      %p248 = scmp.eq.s32.totalorder %s34, 1
      %p249 = por %p247, %p248
      %p251 = scmp.ne.s32.totalorder %s236, %s250
      %p252 = scmp.eq.s32.totalorder %s34, 0
      %p253 = por %p251, %p252
      %s255 = sadd.s32 %s254, 1
      %p258 = scmp.eq.s32.totalorder %s28, 1
      %p259 = scmp.ne.s32.totalorder %s254, %s256
      %p260 = scmp.eq.s32.totalorder %s28, 0
      %p261 = por %p259, %p260
      %p262 = scmp.ne.s32.totalorder %s254, %s256
      %p263 = scmp.eq.s32.totalorder %s33, 1
      %p264 = por %p262, %p263
      %p265 = scmp.ne.s32.totalorder %s256, %s257
      %p266 = scmp.eq.s32.totalorder %s33, 0
      %p267 = por %p265, %p266
      %p268 = scmp.ne.s32.totalorder %s256, %s257
      %p269 = scmp.eq.s32.totalorder %s34, 1
      %p270 = por %p268, %p269
      %p272 = scmp.ne.s32.totalorder %s257, %s271
      %p273 = scmp.eq.s32.totalorder %s34, 0
      %p274 = por %p272, %p273
      %s276 = sadd.s32 %s275, 1
      %p279 = scmp.eq.s32.totalorder %s28, 1
      %p280 = scmp.ne.s32.totalorder %s275, %s277
      %p281 = scmp.eq.s32.totalorder %s28, 0
      %p282 = por %p280, %p281
      %p283 = scmp.ne.s32.totalorder %s275, %s277
      %p284 = scmp.eq.s32.totalorder %s33, 1
      %p285 = por %p283, %p284
      %p286 = scmp.ne.s32.totalorder %s277, %s278
      %p287 = scmp.eq.s32.totalorder %s33, 0
      %p288 = por %p286, %p287
      %p289 = scmp.ne.s32.totalorder %s277, %s278
      %p290 = scmp.eq.s32.totalorder %s34, 1
      %p291 = por %p289, %p290
      %p293 = scmp.ne.s32.totalorder %s278, %s292
      %p294 = scmp.eq.s32.totalorder %s34, 0
      %p295 = por %p293, %p294
      %s296 = ssub.s32 %s35, %s47
      %s297 = ssub.s32 %s36, %s43
      %s298 = sor.u32 %s296, %s297
      %p299 = scmp.eq.s32.totalorder %s298, 0
      %s301 = sadd.s32 %s300, 1
      %s302 = scalar_select %p299, %s300, %s301
      %p305 = pneg %p299
      %p306 = scmp.eq.s32.totalorder %s28, 1
      %p307 = por %p305, %p306
      %p308 = scmp.ne.s32.totalorder %s300, %s303
      %p309 = scmp.eq.s32.totalorder %s28, 0
      %p310 = por %p308, %p309
      %p311 = scmp.ne.s32.totalorder %s300, %s303
      %p312 = scmp.eq.s32.totalorder %s33, 1
      %p313 = por %p311, %p312
      %p314 = scmp.ne.s32.totalorder %s303, %s304
      %p315 = scmp.eq.s32.totalorder %s33, 0
      %p316 = por %p314, %p315
      %p317 = scmp.ne.s32.totalorder %s303, %s304
      %p318 = scmp.eq.s32.totalorder %s34, 1
      %p319 = por %p317, %p318
      %p321 = scmp.ne.s32.totalorder %s304, %s320
      %p322 = scmp.eq.s32.totalorder %s34, 0
      %p323 = por %p321, %p322
      %p324 = scmp.le.s32.totalorder 1, %s28
      %p325 = scmp.lt.s32.totalorder %s28, 3
      %p326 = pnand %p324, %p325
      %p327 = pneg %p326
      // Predicated region
      $region9: #{tpu_custom_call.1} parent=5 // pred_check
        _
      $region10: #{tpu_custom_call.1} parent=5 // pred_check_branch
        %329 = sbr.rel (%p326) target = $region12
      $region11: #{tpu_custom_call.1} parent=5 // pred_region
        %s330 = ssub.s32 %s28, 1
        // Predicated region
        $region13: #{tpu_custom_call.1} parent=11 // pred_check
          %p331 = pneg %p141
        $region14: #{tpu_custom_call.1} parent=11 // pred_check_branch
          %333 = sbr.rel (%p331) target = $region16
        $region15: #{tpu_custom_call.1} parent=11 // pred_region
          %335 = vsyncadd [#allocation12], 0
          %s336 = sshll.u32 %s3, 4
          %s337 = int_to_ptr.hbm [resolvable:$true] %s336
          %s338 = sshll.u32 [#allocation11], 4
          %s339 = int_to_ptr.vmem [resolvable:$true] %s338
          %344 = dma.hbm_to_vmem [thread:$0]  %s337, 512, %s339, [#allocation12], 128, 128, 8
        $region16: #{tpu_custom_call.1} parent=11 // pred_fallthru
          _
        // Predicated region
        $region17: #{tpu_custom_call.1} parent=11 // pred_check
          %p345 = pneg %p162
        $region18: #{tpu_custom_call.1} parent=11 // pred_check_branch
          %347 = sbr.rel (%p345) target = $region20
        $region19: #{tpu_custom_call.1} parent=11 // pred_region
          _
        $region20: #{tpu_custom_call.1} parent=11 // pred_fallthru
          _
        // Predicated region
        $region21: #{tpu_custom_call.1} parent=11 // pred_check
          %p348 = pneg %p183
        $region22: #{tpu_custom_call.1} parent=11 // pred_check_branch
          %350 = sbr.rel (%p348) target = $region24
        $region23: #{tpu_custom_call.1} parent=11 // pred_region
          %352 = vsyncadd [#allocation12], 0
          %s353 = sshll.u32 %s5, 4
          %s354 = int_to_ptr.hbm [resolvable:$true] %s353
          %s355 = sshll.u32 [#allocation13], 4
          %s356 = int_to_ptr.vmem [resolvable:$true] %s355
          %361 = dma.hbm_to_vmem [thread:$0]  %s354, 512, %s356, [#allocation12], 128, 128, 8
        $region24: #{tpu_custom_call.1} parent=11 // pred_fallthru
          _
        // Predicated region
        $region25: #{tpu_custom_call.1} parent=11 // pred_check
          %p362 = pneg %p204
        $region26: #{tpu_custom_call.1} parent=11 // pred_check_branch
          %364 = sbr.rel (%p362) target = $region28
        $region27: #{tpu_custom_call.1} parent=11 // pred_region
          _
        $region28: #{tpu_custom_call.1} parent=11 // pred_fallthru
          _
        // Predicated region
        $region29: #{tpu_custom_call.1} parent=11 // pred_check
          %p365 = pneg %p225
        $region30: #{tpu_custom_call.1} parent=11 // pred_check_branch
          %367 = sbr.rel (%p365) target = $region32
        $region31: #{tpu_custom_call.1} parent=11 // pred_region
          %369 = vsyncadd [#allocation15], 0
          %s370 = sshll.u32 %s7, 4
          %s371 = int_to_ptr.hbm [resolvable:$true] %s370
          %s372 = sshll.u32 [#allocation14], 4
          %s373 = int_to_ptr.vmem [resolvable:$true] %s372
          %378 = dma.hbm_to_vmem [thread:$0]  %s371, 512, %s373, [#allocation15], 128, 128, 8
        $region32: #{tpu_custom_call.1} parent=11 // pred_fallthru
          _
        // Predicated region
        $region33: #{tpu_custom_call.1} parent=11 // pred_check
          %p379 = pneg %p246
        $region34: #{tpu_custom_call.1} parent=11 // pred_check_branch
          %381 = sbr.rel (%p379) target = $region36
        $region35: #{tpu_custom_call.1} parent=11 // pred_region
          _
        $region36: #{tpu_custom_call.1} parent=11 // pred_fallthru
          _
        // Predicated region
        $region37: #{tpu_custom_call.1} parent=11 // pred_check
          %p382 = pneg %p267
        $region38: #{tpu_custom_call.1} parent=11 // pred_check_branch
          %384 = sbr.rel (%p382) target = $region40
        $region39: #{tpu_custom_call.1} parent=11 // pred_region
          %386 = vsyncadd [#allocation15], 0
          %s387 = sshll.u32 %s9, 4
          %s388 = int_to_ptr.hbm [resolvable:$true] %s387
          %s389 = sshll.u32 [#allocation16], 4
          %s390 = int_to_ptr.vmem [resolvable:$true] %s389
          %395 = dma.hbm_to_vmem [thread:$0]  %s388, 512, %s390, [#allocation15], 128, 128, 8
        $region40: #{tpu_custom_call.1} parent=11 // pred_fallthru
          _
        // Predicated region
        $region41: #{tpu_custom_call.1} parent=11 // pred_check
          %p396 = pneg %p288
        $region42: #{tpu_custom_call.1} parent=11 // pred_check_branch
          %398 = sbr.rel (%p396) target = $region44
        $region43: #{tpu_custom_call.1} parent=11 // pred_region
          _
        $region44: #{tpu_custom_call.1} parent=11 // pred_fallthru
          _
      $region12: #{tpu_custom_call.1} parent=5 // pred_fallthru
        _
      %p399 = scmp.lt.s32.totalorder %s28, 2
      // Predicated region
      $region45: #{tpu_custom_call.1} parent=5 // pred_check
        %p400 = pneg %p399
      $region46: #{tpu_custom_call.1} parent=5 // pred_check_branch
        %402 = sbr.rel (%p400) target = $region48
      $region47: #{tpu_custom_call.1} parent=5 // pred_region
        // Predicated region
        $region49: #{tpu_custom_call.1} parent=47 // pred_check
          %p403 = pneg %p62
        $region50: #{tpu_custom_call.1} parent=47 // pred_check_branch
          %405 = sbr.rel (%p403) target = $region52
        $region51: #{tpu_custom_call.1} parent=47 // pred_region
          %s406 = sand.u32 %s52, 1
          %s407 = scalar_lea.sflag [#allocation6], %s406
          %s408 = sand.u32 %s52, 1
          %s409 = smul.addr %s408, 8
          %s410 = scalar_lea.vmem [#allocation5], %s409
          %412 = vsyncadd %s407, 0
          %s413 = sadd.s32 %s36, %s35
          %s414 = smul.addr %s413, 8
          %s415 = scalar_lea.hbm %s0, %s414
          %s417 = sshll.u32 %s415, 4
          %s418 = int_to_ptr.hbm [resolvable:$true] %s417
          %s419 = sshll.u32 %s410, 4
          %s420 = int_to_ptr.vmem [resolvable:$true] %s419
          %422 = dma.hbm_to_vmem [thread:$0]  %s418, 128, %s420, %s407
        $region52: #{tpu_custom_call.1} parent=47 // pred_fallthru
          _
        // Predicated region
        $region53: #{tpu_custom_call.1} parent=47 // pred_check
          %p423 = pneg %p88
        $region54: #{tpu_custom_call.1} parent=47 // pred_check_branch
          %425 = sbr.rel (%p423) target = $region56
        $region55: #{tpu_custom_call.1} parent=47 // pred_region
          %s426 = sand.u32 %s28, 1
          %s427 = scalar_lea.sflag [#allocation9], %s426
          %s428 = sand.u32 %s78, 1
          %s429 = smul.addr %s428, 8
          %s430 = scalar_lea.vmem [#allocation8], %s429
          %432 = vsyncadd %s427, 0
          %s433 = smul.addr %s35, 8
          %s434 = scalar_lea.hbm %s1, %s433
          %s436 = sshll.u32 %s434, 4
          %s437 = int_to_ptr.hbm [resolvable:$true] %s436
          %s438 = sshll.u32 %s430, 4
          %s439 = int_to_ptr.vmem [resolvable:$true] %s438
          %441 = dma.hbm_to_vmem [thread:$0]  %s437, 128, %s439, %s427
        $region56: #{tpu_custom_call.1} parent=47 // pred_fallthru
          _
        // Predicated region
        $region57: #{tpu_custom_call.1} parent=47 // pred_check
          %p442 = pneg %p114
        $region58: #{tpu_custom_call.1} parent=47 // pred_check_branch
          %444 = sbr.rel (%p442) target = $region60
        $region59: #{tpu_custom_call.1} parent=47 // pred_region
          %s445 = sand.u32 %s28, 1
          %s446 = scalar_lea.sflag [#allocation9], %s445
          %s447 = sand.u32 %s104, 1
          %s448 = smul.addr %s447, 8
          %s449 = scalar_lea.vmem [#allocation10], %s448
          %451 = vsyncadd %s446, 0
          %s452 = smul.addr %s35, 8
          %s453 = scalar_lea.hbm %s2, %s452
          %s455 = sshll.u32 %s453, 4
          %s456 = int_to_ptr.hbm [resolvable:$true] %s455
          %s457 = sshll.u32 %s449, 4
          %s458 = int_to_ptr.vmem [resolvable:$true] %s457
          %460 = dma.hbm_to_vmem [thread:$0]  %s456, 128, %s458, %s446
        $region60: #{tpu_custom_call.1} parent=47 // pred_fallthru
          _
      $region48: #{tpu_custom_call.1} parent=5 // pred_fallthru
        _
      %p461 = scmp.le.s32.totalorder 1, %s28
      %p462 = scmp.lt.s32.totalorder %s28, 3
      %p463 = pnand %p461, %p462
      %p464 = pneg %p463
      // Predicated region
      $region61: #{tpu_custom_call.1} parent=5 // pred_check
        _
      $region62: #{tpu_custom_call.1} parent=5 // pred_check_branch
        %466 = sbr.rel (%p463) target = $region64
      $region63: #{tpu_custom_call.1} parent=5 // pred_region
        %s467 = ssub.s32 %s28, 1
        %s468 = sand.u32 %s55, 1
        %s469 = scalar_lea.sflag [#allocation6], %s468
        %s470 = sand.u32 %s55, 1
        %s471 = smul.addr %s470, 8
        %s472 = scalar_lea.vmem [#allocation5], %s471
        // Predicated region
        $region65: #{tpu_custom_call.1} parent=63 // pred_check
          %p473 = pneg %p68
        $region66: #{tpu_custom_call.1} parent=63 // pred_check_branch
          %475 = sbr.rel (%p473) target = $region68
        $region67: #{tpu_custom_call.1} parent=63 // pred_region
          %477 = dma.done %s469, 128
        $region68: #{tpu_custom_call.1} parent=63 // pred_fallthru
          _
        %s478 = sand.u32 %s33, 1
        %s479 = scalar_lea.sflag [#allocation9], %s478
        %s480 = sand.u32 %s81, 1
        %s481 = smul.addr %s480, 8
        %s482 = scalar_lea.vmem [#allocation8], %s481
        // Predicated region
        $region69: #{tpu_custom_call.1} parent=63 // pred_check
          %p483 = pneg %p94
        $region70: #{tpu_custom_call.1} parent=63 // pred_check_branch
          %485 = sbr.rel (%p483) target = $region72
        $region71: #{tpu_custom_call.1} parent=63 // pred_region
          %487 = dma.done %s479, 128
        $region72: #{tpu_custom_call.1} parent=63 // pred_fallthru
          _
        %s488 = sand.u32 %s33, 1
        %s489 = scalar_lea.sflag [#allocation9], %s488
        %s490 = sand.u32 %s107, 1
        %s491 = smul.addr %s490, 8
        %s492 = scalar_lea.vmem [#allocation10], %s491
        // Predicated region
        $region73: #{tpu_custom_call.1} parent=63 // pred_check
          %p493 = pneg %p120
        $region74: #{tpu_custom_call.1} parent=63 // pred_check_branch
          %495 = sbr.rel (%p493) target = $region76
        $region75: #{tpu_custom_call.1} parent=63 // pred_region
          %497 = dma.done %s489, 128
        $region76: #{tpu_custom_call.1} parent=63 // pred_fallthru
          _
        // Predicated region
        $region77: #{tpu_custom_call.1} parent=63 // pred_check
          %p498 = pneg %p141
        $region78: #{tpu_custom_call.1} parent=63 // pred_check_branch
          %500 = sbr.rel (%p498) target = $region80
        $region79: #{tpu_custom_call.1} parent=63 // pred_region
          %502 = dma.done [#allocation12], 512
        $region80: #{tpu_custom_call.1} parent=63 // pred_fallthru
          _
        // Predicated region
        $region81: #{tpu_custom_call.1} parent=63 // pred_check
          %p503 = pneg %p183
        $region82: #{tpu_custom_call.1} parent=63 // pred_check_branch
          %505 = sbr.rel (%p503) target = $region84
        $region83: #{tpu_custom_call.1} parent=63 // pred_region
          %507 = dma.done [#allocation12], 512
        $region84: #{tpu_custom_call.1} parent=63 // pred_fallthru
          _
        // Predicated region
        $region85: #{tpu_custom_call.1} parent=63 // pred_check
          %p508 = pneg %p225
        $region86: #{tpu_custom_call.1} parent=63 // pred_check_branch
          %510 = sbr.rel (%p508) target = $region88
        $region87: #{tpu_custom_call.1} parent=63 // pred_region
          %512 = dma.done [#allocation15], 512
        $region88: #{tpu_custom_call.1} parent=63 // pred_fallthru
          _
        // Predicated region
        $region89: #{tpu_custom_call.1} parent=63 // pred_check
          %p513 = pneg %p267
        $region90: #{tpu_custom_call.1} parent=63 // pred_check_branch
          %515 = sbr.rel (%p513) target = $region92
        $region91: #{tpu_custom_call.1} parent=63 // pred_region
          %517 = dma.done [#allocation15], 512
        $region92: #{tpu_custom_call.1} parent=63 // pred_fallthru
          _
        %s518 = sand.u32 %s55, 1
        %s519 = scalar_lea.sflag [#allocation6], %s518
        %s520 = sand.u32 %s55, 1
        %s521 = smul.addr %s520, 8
        %s522 = scalar_lea.vmem [#allocation5], %s521
        %p523 = pneg %p68
        %p524 = pneg %p65
        %s525 = sand.u32 %s33, 1
        %s526 = scalar_lea.sflag [#allocation9], %s525
        %s527 = sand.u32 %s81, 1
        %s528 = smul.addr %s527, 8
        %s529 = scalar_lea.vmem [#allocation8], %s528
        %p530 = pneg %p94
        %p531 = pneg %p91
        %s532 = sand.u32 %s33, 1
        %s533 = scalar_lea.sflag [#allocation9], %s532
        %s534 = sand.u32 %s107, 1
        %s535 = smul.addr %s534, 8
        %s536 = scalar_lea.vmem [#allocation10], %s535
        %p537 = pneg %p120
        %p538 = pneg %p117
        %p539 = pneg %p141
        %p540 = pneg %p138
        %p541 = pneg %p162
        %p542 = pneg %p159
        %p543 = pneg %p183
        %p544 = pneg %p180
        %p545 = pneg %p204
        %p546 = pneg %p201
        %p547 = pneg %p225
        %p548 = pneg %p222
        %p549 = pneg %p246
        %p550 = pneg %p243
        %p551 = pneg %p267
        %p552 = pneg %p264
        %p553 = pneg %p288
        %p554 = pneg %p285
        %p555 = pneg %p316
        %p556 = pneg %p313
        %s557 = sand.u32 %s303, 1
        %s558 = scalar_lea.sflag [#allocation7], %s557
        %s559 = sand.u32 %s303, 1
        %s560 = smul.addr %s559, 8
        %s561 = scalar_lea.vmem [#allocation17], %s560
        %p562 = scmp.eq.s32.totalorder %s38, 0
        // Predicated region
        $region93: #{tpu_custom_call.1} parent=63 // pred_check
          %p563 = pneg %p562
        $region94: #{tpu_custom_call.1} parent=63 // pred_check_branch
          %565 = sbr.rel (%p563) target = $region96
        $region95: #{tpu_custom_call.1} parent=63 // pred_region
          %v566 = vld [vmem:[%s482] sm:$0xff]
          %v567 = vld [vmem:[#allocation13] sm:$0xff]
          %v568 = vld [vmem:[#allocation13 + $0x8] sm:$0xff]
          %v569 = vld [vmem:[#allocation13 + $0x10] sm:$0xff]
          %v570 = vld [vmem:[#allocation13 + $0x18] sm:$0xff]
          %v571 = vld [vmem:[%s6] sm:$0x1]
          %v573 = vperm.slane %v571, 0
          %vm575 = vcmask 261120
          %v577 = vsel %vm575, %v566, 0
          %579 = vmatpush.msra.mxu0 0.0
          %580 = vmatpush.msra.mxu0 0.0
          %581 = vmatpush.msra.mxu0 0.0
          %582 = vmatpush.msra.mxu0 0.0
          %583 = vmatpush.msra.mxu0 0.0
          %584 = vmatpush.msra.mxu0 0.0
          %585 = vmatpush.msra.mxu0 0.0
          %586 = vmatpush.msra.mxu0 0.0
          %587 = vmatpush.msra.mxu0 0.0
          %588 = vmatpush.msra.mxu0 0.0
          %589 = vmatpush.msra.mxu0 0.0
          %590 = vmatpush.msra.mxu0 0.0
          %591 = vmatpush.msra.mxu0 %v570
          %592 = vmatpush.msra.mxu0 %v569
          %593 = vmatpush.msra.mxu0 %v568
          %594 = vmatpush.msra.mxu0 %v567
          %595 = vmatmul.f32.gmra.mxu0 %v577
          %v596 = vpop.f32.mrf.mxu0
          %v597 = vadd.f32 %v573, %v596
          %598 = vdwg.mxu0
          %v599 = vld [vmem:[%s492] sm:$0xff]
          %v600 = vld [vmem:[#allocation14] sm:$0xff]
          %v601 = vld [vmem:[#allocation14 + $0x8] sm:$0xff]
          %v602 = vld [vmem:[#allocation14 + $0x10] sm:$0xff]
          %v603 = vld [vmem:[#allocation14 + $0x18] sm:$0xff]
          %v604 = vld [vmem:[%s8] sm:$0x1]
          %v606 = vperm.slane %v604, 0
          %v609 = vsel %vm575, %v599, 0
          %611 = vmatpush.msra.mxu0 0.0
          %612 = vmatpush.msra.mxu0 0.0
          %613 = vmatpush.msra.mxu0 0.0
          %614 = vmatpush.msra.mxu0 0.0
          %615 = vmatpush.msra.mxu0 0.0
          %616 = vmatpush.msra.mxu0 0.0
          %617 = vmatpush.msra.mxu0 0.0
          %618 = vmatpush.msra.mxu0 0.0
          %619 = vmatpush.msra.mxu0 0.0
          %620 = vmatpush.msra.mxu0 0.0
          %621 = vmatpush.msra.mxu0 0.0
          %622 = vmatpush.msra.mxu0 0.0
          %623 = vmatpush.msra.mxu0 %v603
          %624 = vmatpush.msra.mxu0 %v602
          %625 = vmatpush.msra.mxu0 %v601
          %626 = vmatpush.msra.mxu0 %v600
          %627 = vmatmul.f32.gmra.mxu0 %v609
          %v628 = vpop.f32.mrf.mxu0
          %v629 = vadd.f32 %v606, %v628
          %630 = vdwg.mxu0
          %631 = vst.msk [vmem:[#allocation2] sm:$0xff] %vm575, %v597
          %632 = vst.msk [vmem:[#allocation3] sm:$0xff] %vm575, %v629
        $region96: #{tpu_custom_call.1} parent=63 // pred_fallthru
          _
        %v633 = vld [vmem:[%s472] sm:$0xff]
        %v634 = vld [vmem:[#allocation11] sm:$0xff]
        %v635 = vld [vmem:[#allocation11 + $0x8] sm:$0xff]
        %v636 = vld [vmem:[#allocation11 + $0x10] sm:$0xff]
        %v637 = vld [vmem:[#allocation11 + $0x18] sm:$0xff]
        %v638 = vld [vmem:[%s4] sm:$0x1]
        %v640 = vperm.slane %v638, 0
        %vm642 = vcmask 261120
        %v644 = vsel %vm642, %v633, 0
        %646 = vmatpush.msra.mxu0 0.0
        %647 = vmatpush.msra.mxu0 0.0
        %648 = vmatpush.msra.mxu0 0.0
        %649 = vmatpush.msra.mxu0 0.0
        %650 = vmatpush.msra.mxu0 0.0
        %651 = vmatpush.msra.mxu0 0.0
        %652 = vmatpush.msra.mxu0 0.0
        %653 = vmatpush.msra.mxu0 0.0
        %654 = vmatpush.msra.mxu0 0.0
        %655 = vmatpush.msra.mxu0 0.0
        %656 = vmatpush.msra.mxu0 0.0
        %657 = vmatpush.msra.mxu0 0.0
        %658 = vmatpush.msra.mxu0 %v637
        %659 = vmatpush.msra.mxu0 %v636
        %660 = vmatpush.msra.mxu0 %v635
        %661 = vmatpush.msra.mxu0 %v634
        %662 = vmatmul.f32.gmra.mxu0 %v644
        %v663 = vpop.f32.mrf.mxu0
        %v664 = vadd.f32 %v640, %v663
        %665 = vdwg.mxu0
        %v666 = vmul.f32 %v664, 0.35355338
        %v667 = vld [vmem:[#allocation2] sm:$0xff]
        %v668 = vld [vmem:[#allocation3] sm:$0xff]
        %vm669 = vcmask 64512
        %v671 = vsel %vm669, %v666, 0
        %v674 = vsel %vm669, %v667, 0
        %676 = vmatpush.xpose.msra.mxu0 0.0
        %677 = vmatpush.xpose.msra.mxu0 0.0
        %678 = vmatpush.xpose.msra.mxu0 0.0
        %679 = vmatpush.xpose.msra.mxu0 0.0
        %680 = vmatpush.xpose.msra.mxu0 0.0
        %681 = vmatpush.xpose.msra.mxu0 0.0
        %682 = vmatpush.xpose.msra.mxu0 0.0
        %683 = vmatpush.xpose.msra.mxu0 0.0
        %684 = vmatpush.xpose.msra.mxu0 0.0
        %685 = vmatpush.xpose.msra.mxu0 0.0
        %686 = vmatpush.xpose.msra.mxu0 0.0
        %687 = vmatpush.xpose.msra.mxu0 0.0
        %688 = vmatpush.xpose.msra.mxu0 0.0
        %689 = vmatpush.xpose.msra.mxu0 0.0
        %690 = vmatpush.xpose.msra.mxu0 0.0
        %691 = vmatpush.xpose.msra.mxu0 %v674
        %692 = vmatmul.f32.gmra.mxu0 %v671
        %v693 = vpop.f32.mrf.mxu0
        %v694 = vadd.f32 0.0, %v693
        %695 = vdwg.mxu0
        %v696 = vsel %vm669, %v694, -inf
        %697 = vmax.xlane.f32.xlu0 %v696
        %v698 = vpop.xlane.xlu0 %697
        %v699 = vsub.f32 %v694, %v698
        %v700 = vmul.f32 %v699, 1.442695
        %v701 = vpow.pop %v700
        %v702 = vsel %vm669, %v701, 0.0
        %703 = vadd.xlane.f32.xlu0 %v702
        %v704 = vpop.xlane.xlu0 %703
        %v705 = vrcp.pop %v704
        %v706 = vmul.f32 %v701, %v705
        %v708 = vsel %vm669, %v706, 0
        %710 = vmatpush.msra.mxu0 0.0
        %711 = vmatpush.msra.mxu0 0.0
        %712 = vmatpush.msra.mxu0 0.0
        %713 = vmatpush.msra.mxu0 0.0
        %714 = vmatpush.msra.mxu0 0.0
        %715 = vmatpush.msra.mxu0 0.0
        %716 = vmatpush.msra.mxu0 0.0
        %717 = vmatpush.msra.mxu0 0.0
        %718 = vmatpush.msra.mxu0 0.0
        %719 = vmatpush.msra.mxu0 0.0
        %720 = vmatpush.msra.mxu0 0.0
        %721 = vmatpush.msra.mxu0 0.0
        %722 = vmatpush.msra.mxu0 0.0
        %723 = vmatpush.msra.mxu0 0.0
        %724 = vmatpush.msra.mxu0 0.0
        %725 = vmatpush.msra.mxu0 %v668
        %726 = vmatmul.f32.gmra.mxu0 %v708
        %v727 = vpop.f32.mrf.mxu0
        %v728 = vadd.f32 0.0, %v727
        %729 = vdwg.mxu0
        %730 = vst.msk [vmem:[#allocation4] sm:$0xff] %vm669, %v728
        %731 = vrot.lane.b32.xlu0 %v666, 120
        %v732 = vpop.permute.xlu0 %731
        %733 = vrot.lane.b32.xlu0 %v667, 120
        %v734 = vpop.permute.xlu0 %733
        %v735 = vsel %vm669, %v732, 0
        %v737 = vsel %vm669, %v734, 0
        %739 = vmatpush.xpose.msra.mxu0 0.0
        %740 = vmatpush.xpose.msra.mxu0 0.0
        %741 = vmatpush.xpose.msra.mxu0 0.0
        %742 = vmatpush.xpose.msra.mxu0 0.0
        %743 = vmatpush.xpose.msra.mxu0 0.0
        %744 = vmatpush.xpose.msra.mxu0 0.0
        %745 = vmatpush.xpose.msra.mxu0 0.0
        %746 = vmatpush.xpose.msra.mxu0 0.0
        %747 = vmatpush.xpose.msra.mxu0 0.0
        %748 = vmatpush.xpose.msra.mxu0 0.0
        %749 = vmatpush.xpose.msra.mxu0 0.0
        %750 = vmatpush.xpose.msra.mxu0 0.0
        %751 = vmatpush.xpose.msra.mxu0 0.0
        %752 = vmatpush.xpose.msra.mxu0 0.0
        %753 = vmatpush.xpose.msra.mxu0 0.0
        %754 = vmatpush.xpose.msra.mxu0 %v737
        %755 = vmatmul.f32.gmra.mxu0 %v735
        %v756 = vpop.f32.mrf.mxu0
        %v757 = vadd.f32 0.0, %v756
        %758 = vdwg.mxu0
        %v759 = vsel %vm669, %v757, -inf
        %760 = vmax.xlane.f32.xlu0 %v759
        %v761 = vpop.xlane.xlu0 %760
        %v762 = vsub.f32 %v757, %v761
        %v763 = vmul.f32 %v762, 1.442695
        %v764 = vpow.pop %v763
        %v765 = vsel %vm669, %v764, 0.0
        %766 = vadd.xlane.f32.xlu0 %v765
        %v767 = vpop.xlane.xlu0 %766
        %v768 = vrcp.pop %v767
        %v769 = vmul.f32 %v764, %v768
        %771 = vrot.lane.b32.xlu0 %v668, 120
        %v772 = vpop.permute.xlu0 %771
        %v775 = vsel %vm669, %v769, 0
        %777 = vmatpush.msra.mxu0 0.0
        %778 = vmatpush.msra.mxu0 0.0
        %779 = vmatpush.msra.mxu0 0.0
        %780 = vmatpush.msra.mxu0 0.0
        %781 = vmatpush.msra.mxu0 0.0
        %782 = vmatpush.msra.mxu0 0.0
        %783 = vmatpush.msra.mxu0 0.0
        %784 = vmatpush.msra.mxu0 0.0
        %785 = vmatpush.msra.mxu0 0.0
        %786 = vmatpush.msra.mxu0 0.0
        %787 = vmatpush.msra.mxu0 0.0
        %788 = vmatpush.msra.mxu0 0.0
        %789 = vmatpush.msra.mxu0 0.0
        %790 = vmatpush.msra.mxu0 0.0
        %791 = vmatpush.msra.mxu0 0.0
        %792 = vmatpush.msra.mxu0 %v772
        %793 = vmatmul.f32.gmra.mxu0 %v775
        %v794 = vpop.f32.mrf.mxu0
        %v795 = vadd.f32 0.0, %v794
        %796 = vdwg.mxu0
        %798 = vrot.lane.b32.xlu0 %v795, 8
        %v799 = vpop.permute.xlu0 %798
        %vm801 = vcmask 130112
        %802 = vst.msk [vmem:[#allocation4] sm:$0xff] %vm801, %v799
        %803 = vrot.lane.b32.xlu0 %v666, 112
        %v804 = vpop.permute.xlu0 %803
        %805 = vrot.lane.b32.xlu0 %v667, 112
        %v806 = vpop.permute.xlu0 %805
        %v807 = vsel %vm669, %v804, 0
        %v809 = vsel %vm669, %v806, 0
        %811 = vmatpush.xpose.msra.mxu0 0.0
        %812 = vmatpush.xpose.msra.mxu0 0.0
        %813 = vmatpush.xpose.msra.mxu0 0.0
        %814 = vmatpush.xpose.msra.mxu0 0.0
        %815 = vmatpush.xpose.msra.mxu0 0.0
        %816 = vmatpush.xpose.msra.mxu0 0.0
        %817 = vmatpush.xpose.msra.mxu0 0.0
        %818 = vmatpush.xpose.msra.mxu0 0.0
        %819 = vmatpush.xpose.msra.mxu0 0.0
        %820 = vmatpush.xpose.msra.mxu0 0.0
        %821 = vmatpush.xpose.msra.mxu0 0.0
        %822 = vmatpush.xpose.msra.mxu0 0.0
        %823 = vmatpush.xpose.msra.mxu0 0.0
        %824 = vmatpush.xpose.msra.mxu0 0.0
        %825 = vmatpush.xpose.msra.mxu0 0.0
        %826 = vmatpush.xpose.msra.mxu0 %v809
        %827 = vmatmul.f32.gmra.mxu0 %v807
        %v828 = vpop.f32.mrf.mxu0
        %v829 = vadd.f32 0.0, %v828
        %830 = vdwg.mxu0
        %v831 = vsel %vm669, %v829, -inf
        %832 = vmax.xlane.f32.xlu0 %v831
        %v833 = vpop.xlane.xlu0 %832
        %v834 = vsub.f32 %v829, %v833
        %v835 = vmul.f32 %v834, 1.442695
        %v836 = vpow.pop %v835
        %v837 = vsel %vm669, %v836, 0.0
        %838 = vadd.xlane.f32.xlu0 %v837
        %v839 = vpop.xlane.xlu0 %838
        %v840 = vrcp.pop %v839
        %v841 = vmul.f32 %v836, %v840
        %842 = vrot.lane.b32.xlu0 %v668, 112
        %v843 = vpop.permute.xlu0 %842
        %v846 = vsel %vm669, %v841, 0
        %848 = vmatpush.msra.mxu0 0.0
        %849 = vmatpush.msra.mxu0 0.0
        %850 = vmatpush.msra.mxu0 0.0
        %851 = vmatpush.msra.mxu0 0.0
        %852 = vmatpush.msra.mxu0 0.0
        %853 = vmatpush.msra.mxu0 0.0
        %854 = vmatpush.msra.mxu0 0.0
        %855 = vmatpush.msra.mxu0 0.0
        %856 = vmatpush.msra.mxu0 0.0
        %857 = vmatpush.msra.mxu0 0.0
        %858 = vmatpush.msra.mxu0 0.0
        %859 = vmatpush.msra.mxu0 0.0
        %860 = vmatpush.msra.mxu0 0.0
        %861 = vmatpush.msra.mxu0 0.0
        %862 = vmatpush.msra.mxu0 0.0
        %863 = vmatpush.msra.mxu0 %v843
        %864 = vmatmul.f32.gmra.mxu0 %v846
        %v865 = vpop.f32.mrf.mxu0
        %v866 = vadd.f32 0.0, %v865
        %867 = vdwg.mxu0
        %869 = vrot.lane.b32.xlu0 %v866, 16
        %v870 = vpop.permute.xlu0 %869
        %vm872 = vcmask 195712
        %873 = vst.msk [vmem:[#allocation4] sm:$0xff] %vm872, %v870
        %874 = vrot.lane.b32.xlu0 %v666, 104
        %v875 = vpop.permute.xlu0 %874
        %876 = vrot.lane.b32.xlu0 %v667, 104
        %v877 = vpop.permute.xlu0 %876
        %v878 = vsel %vm669, %v875, 0
        %v880 = vsel %vm669, %v877, 0
        %882 = vmatpush.xpose.msra.mxu0 0.0
        %883 = vmatpush.xpose.msra.mxu0 0.0
        %884 = vmatpush.xpose.msra.mxu0 0.0
        %885 = vmatpush.xpose.msra.mxu0 0.0
        %886 = vmatpush.xpose.msra.mxu0 0.0
        %887 = vmatpush.xpose.msra.mxu0 0.0
        %888 = vmatpush.xpose.msra.mxu0 0.0
        %889 = vmatpush.xpose.msra.mxu0 0.0
        %890 = vmatpush.xpose.msra.mxu0 0.0
        %891 = vmatpush.xpose.msra.mxu0 0.0
        %892 = vmatpush.xpose.msra.mxu0 0.0
        %893 = vmatpush.xpose.msra.mxu0 0.0
        %894 = vmatpush.xpose.msra.mxu0 0.0
        %895 = vmatpush.xpose.msra.mxu0 0.0
        %896 = vmatpush.xpose.msra.mxu0 0.0
        %897 = vmatpush.xpose.msra.mxu0 %v880
        %898 = vmatmul.f32.gmra.mxu0 %v878
        %v899 = vpop.f32.mrf.mxu0
        %v900 = vadd.f32 0.0, %v899
        %901 = vdwg.mxu0
        %v902 = vsel %vm669, %v900, -inf
        %903 = vmax.xlane.f32.xlu0 %v902
        %v904 = vpop.xlane.xlu0 %903
        %v905 = vsub.f32 %v900, %v904
        %v906 = vmul.f32 %v905, 1.442695
        %v907 = vpow.pop %v906
        %v908 = vsel %vm669, %v907, 0.0
        %909 = vadd.xlane.f32.xlu0 %v908
        %v910 = vpop.xlane.xlu0 %909
        %v911 = vrcp.pop %v910
        %v912 = vmul.f32 %v907, %v911
        %913 = vrot.lane.b32.xlu0 %v668, 104
        %v914 = vpop.permute.xlu0 %913
        %v917 = vsel %vm669, %v912, 0
        %919 = vmatpush.msra.mxu0 0.0
        %920 = vmatpush.msra.mxu0 0.0
        %921 = vmatpush.msra.mxu0 0.0
        %922 = vmatpush.msra.mxu0 0.0
        %923 = vmatpush.msra.mxu0 0.0
        %924 = vmatpush.msra.mxu0 0.0
        %925 = vmatpush.msra.mxu0 0.0
        %926 = vmatpush.msra.mxu0 0.0
        %927 = vmatpush.msra.mxu0 0.0
        %928 = vmatpush.msra.mxu0 0.0
        %929 = vmatpush.msra.mxu0 0.0
        %930 = vmatpush.msra.mxu0 0.0
        %931 = vmatpush.msra.mxu0 0.0
        %932 = vmatpush.msra.mxu0 0.0
        %933 = vmatpush.msra.mxu0 0.0
        %934 = vmatpush.msra.mxu0 %v914
        %935 = vmatmul.f32.gmra.mxu0 %v917
        %v936 = vpop.f32.mrf.mxu0
        %v937 = vadd.f32 0.0, %v936
        %938 = vdwg.mxu0
        %940 = vrot.lane.b32.xlu0 %v937, 24
        %v941 = vpop.permute.xlu0 %940
        %vm943 = vcmask 261312
        %944 = vst.msk [vmem:[#allocation4] sm:$0xff] %vm943, %v941
        %v945 = vld [vmem:[#allocation4] sm:$0xff]
        %v946 = vld [vmem:[#allocation16] sm:$0xff]
        %v947 = vld [vmem:[#allocation16 + $0x8] sm:$0xff]
        %v948 = vld [vmem:[#allocation16 + $0x10] sm:$0xff]
        %v949 = vld [vmem:[#allocation16 + $0x18] sm:$0xff]
        %v950 = vld [vmem:[%s10] sm:$0x1]
        %v952 = vperm.slane %v950, 0
        %v955 = vsel %vm642, %v945, 0
        %957 = vmatpush.msra.mxu0 0.0
        %958 = vmatpush.msra.mxu0 0.0
        %959 = vmatpush.msra.mxu0 0.0
        %960 = vmatpush.msra.mxu0 0.0
        %961 = vmatpush.msra.mxu0 0.0
        %962 = vmatpush.msra.mxu0 0.0
        %963 = vmatpush.msra.mxu0 0.0
        %964 = vmatpush.msra.mxu0 0.0
        %965 = vmatpush.msra.mxu0 0.0
        %966 = vmatpush.msra.mxu0 0.0
        %967 = vmatpush.msra.mxu0 0.0
        %968 = vmatpush.msra.mxu0 0.0
        %969 = vmatpush.msra.mxu0 %v949
        %970 = vmatpush.msra.mxu0 %v948
        %971 = vmatpush.msra.mxu0 %v947
        %972 = vmatpush.msra.mxu0 %v946
        %973 = vmatmul.f32.gmra.mxu0 %v955
        %v974 = vpop.f32.mrf.mxu0
        %v975 = vadd.f32 %v952, %v974
        %976 = vdwg.mxu0
        %977 = vst.msk [vmem:[%s561] sm:$0xff] %vm642, %v975
        %s978 = sand.u32 %s303, 1
        %s979 = scalar_lea.sflag [#allocation7], %s978
        %s980 = sand.u32 %s303, 1
        %s981 = smul.addr %s980, 8
        %s982 = scalar_lea.vmem [#allocation17], %s981
        // Predicated region
        $region97: #{tpu_custom_call.1} parent=63 // pred_check
          %p983 = pneg %p313
        $region98: #{tpu_custom_call.1} parent=63 // pred_check_branch
          %985 = sbr.rel (%p983) target = $region100
        $region99: #{tpu_custom_call.1} parent=63 // pred_region
          %987 = vsyncadd %s979, 0
          %s988 = sadd.s32 %s38, %s37
          %s989 = smul.addr %s988, 8
          %s990 = scalar_lea.hbm %s11, %s989
          %s992 = sshll.u32 %s982, 4
          %s993 = int_to_ptr.vmem [resolvable:$true] %s992
          %s994 = sshll.u32 %s990, 4
          %s995 = int_to_ptr.hbm [resolvable:$true] %s994
          %997 = dma.vmem_to_hbm [thread:$0]  %s993, 128, %s995, %s979
        $region100: #{tpu_custom_call.1} parent=63 // pred_fallthru
          _
      $region64: #{tpu_custom_call.1} parent=5 // pred_fallthru
        _
      %p998 = scmp.le.s32.totalorder 2, %s28
      // Predicated region
      $region101: #{tpu_custom_call.1} parent=5 // pred_check
        %p999 = pneg %p998
      $region102: #{tpu_custom_call.1} parent=5 // pred_check_branch
        %1001 = sbr.rel (%p999) target = $region104
      $region103: #{tpu_custom_call.1} parent=5 // pred_region
        %s1002 = ssub.s32 %s28, 2
        // Predicated region
        $region105: #{tpu_custom_call.1} parent=103 // pred_check
          %p1003 = pneg %p319
        $region106: #{tpu_custom_call.1} parent=103 // pred_check_branch
          %1005 = sbr.rel (%p1003) target = $region108
        $region107: #{tpu_custom_call.1} parent=103 // pred_region
          %s1006 = sand.u32 %s304, 1
          %s1007 = scalar_lea.sflag [#allocation7], %s1006
          %s1008 = sand.u32 %s304, 1
          %s1009 = smul.addr %s1008, 8
          %s1010 = scalar_lea.vmem [#allocation17], %s1009
          %1012 = dma.done %s1007, 128
        $region108: #{tpu_custom_call.1} parent=103 // pred_fallthru
          _
      $region104: #{tpu_custom_call.1} parent=5 // pred_fallthru
        _
    $region6: #{tpu_custom_call.1} parent=1 // loop_footer
      %s32 = sadd.s32 1, %s28
    $region7: #{tpu_custom_call.1} parent=1 // loop_footer_branch
      %27 = sbr.rel target = $region3
    $region8: #{tpu_custom_call.1} parent=1 // loop_exit
      _
    %1013 = vsyncpa [#allocation6], 1
    %s1014 = scalar_lea.sflag [#allocation6], 1
    %1015 = vsyncpa %s1014, 1
    %1016 = vsyncpa [#allocation9], 1
    %s1017 = scalar_lea.sflag [#allocation9], 1
    %1018 = vsyncpa %s1017, 1
    %1019 = vsyncpa [#allocation12], 1
    %1020 = vsyncpa [#allocation15], 1
    %1021 = vsyncpa [#allocation7], 1
    %s1022 = scalar_lea.sflag [#allocation7], 1
    %1023 = vsyncpa %s1022, 1

</llo_original>
